<compile_context>
chip_gen: v6e
topology: v6e:2x2x1
jax: 0.10.0
libtpu: 0.0.40
codegen_flags: <defaults>
</compile_context>

<pallas_src>
import functools

import jax
import jax.numpy as jnp
from jax.experimental import pallas as pl
from jax.experimental.pallas import tpu as pltpu


# ----------------------------------------------------------------------------- kernel

def _bottleneck_mm_kernel(*refs, act, mode):
    """One fused (matmul + folded-BN + residual + activation) tile.

    mode:
      "none"   refs = (x, w, s, b, o)
      "add"    refs = (x, w, s, b, r, o)               pass-through residual
      "dsconv" refs = (x, w, s, b, xid, wd, sd, bd, o) fused downsample identity
    """
    if mode == "none":
        x_ref, w_ref, s_ref, b_ref, o_ref = refs
    elif mode == "add":
        x_ref, w_ref, s_ref, b_ref, r_ref, o_ref = refs
    else:  # "dsconv"
        x_ref, w_ref, s_ref, b_ref, xid_ref, wd_ref, sd_ref, bd_ref, o_ref = refs

    # bf16 x bf16 -> f32 accumulation on the MXU.
    y = jnp.dot(x_ref[...], w_ref[...], preferred_element_type=jnp.float32)
    y = y * s_ref[...] + b_ref[...]                      # folded BatchNorm

    if mode == "add":
        y = y + r_ref[...].astype(jnp.float32)
    elif mode == "dsconv":
        idn = jnp.dot(xid_ref[...], wd_ref[...], preferred_element_type=jnp.float32)
        y = y + (idn * sd_ref[...] + bd_ref[...])        # downsample conv + BN

    if act == "relu":
        y = jnp.maximum(y, 0.0)
    elif act == "leaky":
        y = jnp.maximum(y, 0.01 * y)                     # leaky_relu(0.01)

    o_ref[...] = y.astype(o_ref.dtype)


# ----------------------------------------------------------------------------- tiling

_VMEM_BUDGET = 36 * 1024 * 1024   # headroom under the 48 MiB scoped limit


def _vmem_need(tm, tn, K, Kd, has_res, out_bytes):
    """Double-buffered per-step VMEM working set (bytes)."""
    need = tm * K * 2 + K * tn * 2 + 2 * tn * 4 + tm * tn * out_bytes
    if Kd:
        need += tm * Kd * 2 + Kd * tn * 2 + 2 * tn * 4
    if has_res:
        need += tm * tn * 2
    return 2 * need                                      # 2 pipeline buffers


def _pick_tiles(M, K, Cout, Kd=0, has_res=False, out_bytes=4):
    # Cout tile: bounds the f32 accumulator / output block; small channel counts
    # just use the full dim (full-dim blocks satisfy the (8,128) constraint).
    if Cout % 256 == 0:
        tn = 256
    elif Cout % 128 == 0:
        tn = 128
    else:
        tn = Cout
    # Row tile: biggest that divides M (or the 128 padded fallback) and fits VMEM.
    for tm in (1024, 512, 256, 128):
        divisible = (M % tm == 0) or (tm == 128)
        if divisible and _vmem_need(tm, tn, K, Kd, has_res, out_bytes) <= _VMEM_BUDGET:
            return tm, tn
    # Pathologically large K: shrink rows further (keep 8-aligned sublanes).
    tm = 64
    while tm > 8 and _vmem_need(tm, tn, K, Kd, has_res, out_bytes) > _VMEM_BUDGET:
        tm //= 2
    return max(tm, 8), tn


# ----------------------------------------------------------------------------- wrapper

def fused_matmul(x, w, scale, bias, *, act="none", residual=None, downsample=None,
                 out_dtype=jnp.float32):
    """y = act((x @ w) * scale + bias [+ residual | + BN(xid @ wd)]).

    x: (M, K), w: (K, Cout)        -> fed to the MXU as bf16
    scale/bias: (Cout,)            -> f32 epilogue
    residual: optional (M, Cout)   -> pass-through identity
    downsample: optional (xid, wd, sd, bd) -> 1x1-conv+BN identity, fused in-kernel
    """
    M, K = x.shape
    Cout = w.shape[-1]
    Kd = downsample[0].shape[-1] if downsample is not None else 0
    out_bytes = jnp.dtype(out_dtype).itemsize
    tm, tn = _pick_tiles(M, K, Cout, Kd=Kd, has_res=residual is not None,
                         out_bytes=out_bytes)
    Mp = pl.cdiv(M, tm) * tm
    grid = (Mp // tm, Cout // tn)

    def pad_rows(a):
        return a if Mp == M else jnp.pad(a, ((0, Mp - M), (0, 0)))

    args = [pad_rows(x.astype(jnp.bfloat16)),
            w.astype(jnp.bfloat16),
            scale.reshape(1, Cout).astype(jnp.float32),
            bias.reshape(1, Cout).astype(jnp.float32)]
    in_specs = [
        pl.BlockSpec((tm, K), lambda i, j: (i, 0)),
        pl.BlockSpec((K, tn), lambda i, j: (0, j)),
        pl.BlockSpec((1, tn), lambda i, j: (0, j)),
        pl.BlockSpec((1, tn), lambda i, j: (0, j)),
    ]

    if residual is not None:
        mode = "add"
        args.append(pad_rows(residual.astype(jnp.bfloat16)))
        in_specs.append(pl.BlockSpec((tm, tn), lambda i, j: (i, j)))
    elif downsample is not None:
        mode = "dsconv"
        xid, wd, sd, bd = downsample
        args += [pad_rows(xid.astype(jnp.bfloat16)),
                 wd.astype(jnp.bfloat16),
                 sd.reshape(1, Cout).astype(jnp.float32),
                 bd.reshape(1, Cout).astype(jnp.float32)]
        in_specs += [
            pl.BlockSpec((tm, Kd), lambda i, j: (i, 0)),
            pl.BlockSpec((Kd, tn), lambda i, j: (0, j)),
            pl.BlockSpec((1, tn), lambda i, j: (0, j)),
            pl.BlockSpec((1, tn), lambda i, j: (0, j)),
        ]
    else:
        mode = "none"

    kernel = functools.partial(_bottleneck_mm_kernel, act=act, mode=mode)
    out = pl.pallas_call(
        kernel,
        grid=grid,
        in_specs=in_specs,
        out_specs=pl.BlockSpec((tm, tn), lambda i, j: (i, j)),
        out_shape=jax.ShapeDtypeStruct((Mp, Cout), out_dtype),
        compiler_params=pltpu.CompilerParams(
            dimension_semantics=("parallel", "parallel"),
            vmem_limit_bytes=48 * 1024 * 1024,
        ),
    )(*args)
    return out[:M] if Mp != M else out


# ----------------------------------------------------------------------------- glue

def _fold_bn(gamma, beta, mean, var, eps=1e-5):
    scale = gamma / jnp.sqrt(var + eps)
    bias = beta - mean * scale
    return scale, bias


def _im2col_3x3(x_nhwc, stride):
    """im2col for a pad=1 3x3 conv.  Returns (N*Ho*Wo, 9*C) patches (tap-major
    columns, tap t = kh*3 + kw), plus Ho, Wo."""
    N, H, W, C = x_nhwc.shape
    Ho = (H - 1) // stride + 1
    Wo = (W - 1) // stride + 1
    xp = jnp.pad(x_nhwc, ((0, 0), (1, 1), (1, 1), (0, 0)))
    cols = []
    for kh in range(3):
        for kw in range(3):
            cols.append(xp[:, kh: kh + (Ho - 1) * stride + 1: stride,
                              kw: kw + (Wo - 1) * stride + 1: stride, :])
    patches = jnp.concatenate(cols, axis=-1)             # (N, Ho, Wo, 9*C)
    return patches.reshape(N * Ho * Wo, 9 * C), Ho, Wo


class BottleneckPallas:
    expansion = 4

    def __init__(self, key, in_channels, channels, stride=1):
        self.stride = stride
        out_c = channels * self.expansion
        self.out_c = out_c
        ks = jax.random.split(key, 8)

        def w(k, shape):                                  # weights stored bf16 (MXU-native)
            return (jax.random.normal(k, shape, jnp.float32) * 0.1).astype(jnp.bfloat16)

        def bn(k, c):
            k1, k2, k3, k4 = jax.random.split(k, 4)
            gamma = jax.random.uniform(k1, (c,), jnp.float32, 0.8, 1.2)
            beta = jax.random.normal(k2, (c,), jnp.float32) * 0.1
            mean = jax.random.normal(k3, (c,), jnp.float32) * 0.1
            var = jax.random.uniform(k4, (c,), jnp.float32, 0.5, 1.5)
            return _fold_bn(gamma, beta, mean, var)

        # conv1: 1x1 (Cin -> channels), weight stored (Cin, Cout)
        self.w1 = w(ks[0], (in_channels, channels))
        self.s1, self.b1 = bn(ks[1], channels)
        # conv2: 3x3 (channels -> channels) stored im2col-style as (9*Cin, Cout);
        # row block [t*Cin:(t+1)*Cin] is tap t = kh*3 + kw.
        self.w2 = w(ks[2], (9 * channels, channels))
        self.s2, self.b2 = bn(ks[3], channels)
        # conv3: 1x1 (channels -> out_c)
        self.w3 = w(ks[4], (channels, out_c))
        self.s3, self.b3 = bn(ks[5], out_c)

        self.has_downsample = (in_channels != out_c) or (stride != 1)
        if self.has_downsample:
            self.wd = w(ks[6], (in_channels, out_c))
            self.sd, self.bd = bn(ks[7], out_c)

    def __call__(self, x, channels_last=False):
        # When chaining blocks, pass NHWC with channels_last=True so the
        # NCHW<->NHWC transposes (pure layout glue for the PyTorch API) are hoisted.
        if not channels_last:
            x = jnp.transpose(x, (0, 2, 3, 1))            # NCHW -> NHWC
        N, H, W, Cin = x.shape
        s = self.stride

        # conv1 (1x1) + bn1 + leaky_relu     -> bf16 intermediate
        y1 = fused_matmul(x.reshape(N * H * W, Cin), self.w1, self.s1, self.b1,
                          act="leaky", out_dtype=jnp.bfloat16)
        C = y1.shape[-1]
        y1 = y1.reshape(N, H, W, C)

        # conv2 (3x3, stride s, pad 1) + bn2 + leaky_relu : ONE matmul with K = 9*C
        patches, Ho, Wo = _im2col_3x3(y1, s)
        M2 = N * Ho * Wo
        y2 = fused_matmul(patches, self.w2, self.s2, self.b2,
                          act="leaky", out_dtype=jnp.bfloat16)

        # conv3 (1x1) + bn3 + residual + relu, with the downsample 1x1-conv + BN
        # identity path fused into the SAME kernel (identity never leaves VMEM).
        if self.has_downsample:
            xid = x[:, ::s, ::s, :].reshape(M2, Cin)
            out = fused_matmul(y2, self.w3, self.s3, self.b3, act="relu",
                               downsample=(xid, self.wd, self.sd, self.bd),
                               out_dtype=jnp.float32)
        else:
            out = fused_matmul(y2, self.w3, self.s3, self.b3, act="relu",
                               residual=x.reshape(M2, self.out_c),
                               out_dtype=jnp.float32)

        out = out.reshape(N, Ho, Wo, self.out_c)
        if not channels_last:
            out = jnp.transpose(out, (0, 3, 1, 2))        # NHWC -> NCHW
        return out


# ----------------------------------------------------------------------------- reference

def _ref_forward(block, x_nchw):
    """Pure-JAX f32 reference of the same folded-BN bottleneck math."""
    x = jnp.transpose(x_nchw, (0, 2, 3, 1)).astype(jnp.float32)
    s = block.stride
    N = x.shape[0]

    def leaky(v):
        return jnp.where(v >= 0, v, 0.01 * v)

    y1 = jnp.einsum("nhwc,cd->nhwd", x, block.w1.astype(jnp.float32))
    y1 = leaky(y1 * block.s1 + block.b1)
    patches, Ho, Wo = _im2col_3x3(y1, s)
    y2 = patches.astype(jnp.float32) @ block.w2.astype(jnp.float32)
    y2 = leaky(y2 * block.s2 + block.b2)
    y3 = (y2 @ block.w3.astype(jnp.float32)) * block.s3 + block.b3
    if block.has_downsample:
        xid = x[:, ::s, ::s, :].reshape(-1, x.shape[-1])
        idn = (xid @ block.wd.astype(jnp.float32)) * block.sd + block.bd
    else:
        idn = x.reshape(-1, block.out_c)
    out = jnp.maximum(y3 + idn, 0.0)
    return jnp.transpose(out.reshape(N, Ho, Wo, block.out_c), (0, 3, 1, 2))


# ----------------------------------------------------------------------------- main

if __name__ == "__main__":
    key = jax.random.PRNGKey(0)
    k1, k2, kx1, kx2 = jax.random.split(key, 4)

    # Path 1: downsample block (stride 2, channel expansion) -> fused-identity kernel.
    N, Cin, H, W = 2, 4, 16, 16
    x = jax.random.normal(kx1, (N, Cin, H, W), jnp.float32)
    blk = BottleneckPallas(k1, in_channels=Cin, channels=4, stride=2)
    out = jax.block_until_ready(blk(x))
    assert out.shape == (N, 4 * BottleneckPallas.expansion, H // 2, W // 2), out.shape
    assert bool(jnp.all(jnp.isfinite(out)))
    ref = _ref_forward(blk, x)
    err = float(jnp.max(jnp.abs(out - ref)))
    tol = 0.05 * (1.0 + float(jnp.max(jnp.abs(ref))))    # loose: bf16 MXU operands
    assert err < tol, (err, tol)

    # Path 2: identity pass-through block (stride 1, Cin == channels * 4).
    x2 = jax.random.normal(kx2, (N, 16, H, W), jnp.float32)
    blk2 = BottleneckPallas(k2, in_channels=16, channels=4, stride=1)
    out2 = jax.block_until_ready(blk2(x2))
    assert out2.shape == (N, 16, H, W), out2.shape
    assert bool(jnp.all(jnp.isfinite(out2)))
    ref2 = _ref_forward(blk2, x2)
    err2 = float(jnp.max(jnp.abs(out2 - ref2)))
    tol2 = 0.05 * (1.0 + float(jnp.max(jnp.abs(ref2))))
    assert err2 < tol2, (err2, tol2)

    print("KERNEL_OK")
</pallas_src>

<mosaic_0001>
module attributes {stable_mosaic.version = 11 : i64} {
  func.func @_bottleneck_mm_kernel(%arg0: i32, %arg1: i32, %arg2: memref<512x4xbf16, #tpu.memory_space<vmem>>, %arg3: memref<4x4xbf16, #tpu.memory_space<vmem>>, %arg4: memref<1x4xf32, #tpu.memory_space<vmem>>, %arg5: memref<1x4xf32, #tpu.memory_space<vmem>>, %arg6: memref<512x4xbf16, #tpu.memory_space<vmem>>) attributes {dimension_semantics = [#tpu.dimension_semantics<parallel>, #tpu.dimension_semantics<parallel>], iteration_bounds = array<i64: 1, 1>, scalar_prefetch = 0 : i64, scratch_operands = 0 : i64, tpu.core_type = #tpu.core_type<tc>, window_params = [{transform_indices = @transform_0, window_bounds = array<i64: 512, 4>}, {transform_indices = @transform_1, window_bounds = array<i64: 4, 4>}, {transform_indices = @transform_2, window_bounds = array<i64: 1, 4>}, {transform_indices = @transform_3, window_bounds = array<i64: 1, 4>}, {transform_indices = @transform_4, window_bounds = array<i64: 512, 4>}]} {
    %c0 = arith.constant 0 : index
    %c0_0 = arith.constant 0 : index
    %0 = vector.load %arg2[%c0, %c0_0] : memref<512x4xbf16, #tpu.memory_space<vmem>>, vector<512x4xbf16>
    %c0_1 = arith.constant 0 : index
    %c0_2 = arith.constant 0 : index
    %1 = vector.load %arg3[%c0_1, %c0_2] : memref<4x4xbf16, #tpu.memory_space<vmem>>, vector<4x4xbf16>
    %cst = arith.constant dense<0.000000e+00> : vector<512x4xf32>
    %2 = tpu.matmul %0, %1, %cst {dimension_numbers = #tpu.dot_dimension_numbers<[1], [0], [0], [1], [0, 0, 1, 1], [], []>} : vector<512x4xbf16>, vector<4x4xbf16>, vector<512x4xf32> -> vector<512x4xf32>
    %c0_3 = arith.constant 0 : index
    %c0_4 = arith.constant 0 : index
    %3 = vector.load %arg4[%c0_3, %c0_4] : memref<1x4xf32, #tpu.memory_space<vmem>>, vector<1x4xf32>
    %4 = vector.broadcast %3 : vector<1x4xf32> to vector<512x4xf32>
    %5 = arith.mulf %2, %4 : vector<512x4xf32>
    %c0_5 = arith.constant 0 : index
    %c0_6 = arith.constant 0 : index
    %6 = vector.load %arg5[%c0_5, %c0_6] : memref<1x4xf32, #tpu.memory_space<vmem>>, vector<1x4xf32>
    %7 = vector.broadcast %6 : vector<1x4xf32> to vector<512x4xf32>
    %8 = arith.addf %5, %7 : vector<512x4xf32>
    %cst_7 = arith.constant 0.00999999977 : f32
    %9 = vector.broadcast %cst_7 : f32 to vector<512x4xf32>
    %10 = arith.mulf %9, %8 : vector<512x4xf32>
    %11 = arith.maximumf %8, %10 : vector<512x4xf32>
    %12 = arith.truncf %11 : vector<512x4xf32> to vector<512x4xbf16>
    %c0_8 = arith.constant 0 : index
    %c0_9 = arith.constant 0 : index
    %13 = vector.load %arg6[%c0_8, %c0_9] : memref<512x4xbf16, #tpu.memory_space<vmem>>, vector<512x4xbf16>
    tpu.vector_store %arg6[%c0_8, %c0_9], %12 {strides = array<i32>} : memref<512x4xbf16, #tpu.memory_space<vmem>>, vector<512x4xbf16>,
    return
  }
  func.func @transform_0(%arg0: i32, %arg1: i32) -> (i32, i32) {
    %c0_i32 = arith.constant 0 : i32
    %c0_i32_0 = arith.constant 0 : i32
    return %arg0, %c0_i32 : i32, i32
  }
  func.func @transform_1(%arg0: i32, %arg1: i32) -> (i32, i32) {
    %c0_i32 = arith.constant 0 : i32
    %c0_i32_0 = arith.constant 0 : i32
    return %c0_i32, %arg1 : i32, i32
  }
  func.func @transform_2(%arg0: i32, %arg1: i32) -> (i32, i32) {
    %c0_i32 = arith.constant 0 : i32
    %c0_i32_0 = arith.constant 0 : i32
    return %c0_i32, %arg1 : i32, i32
  }
  func.func @transform_3(%arg0: i32, %arg1: i32) -> (i32, i32) {
    %c0_i32 = arith.constant 0 : i32
    %c0_i32_0 = arith.constant 0 : i32
    return %c0_i32, %arg1 : i32, i32
  }
  func.func @transform_4(%arg0: i32, %arg1: i32) -> (i32, i32) {
    %c0_i32 = arith.constant 0 : i32
    return %arg0, %arg1 : i32, i32
  }
}

</mosaic_0001>

<llo_original>
// kernel: tpu_custom_call.1
$region0: #{tpu_custom_call.1}
  #allocation0 [shape = 'u32[]', space=smem, size = 0x4, offset = 0x4, fixed_abs, tag = 'smem constant byte address 0x4 - core index']
  #allocation1 [shape = 'u32[144,128]{1,0:T(1,128)}', space=vmem, size = 0x12000, scoped, tag = 'internal scratch']
  %s0 = inlined_call_operand.vmem [shape: bf16[512,4], index: 0, kind: input, shape index: {}]
  %s1 = inlined_call_operand.vmem [shape: bf16[4,4], index: 1, kind: input, shape index: {}]
  %s2 = inlined_call_operand.vmem [shape: f32[1,4], index: 2, kind: input, shape index: {}]
  %s3 = inlined_call_operand.vmem [shape: f32[1,4], index: 3, kind: input, shape index: {}]
  %s4 = inlined_call_operand.vmem [shape: bf16[512,4], index: 4, kind: output, shape index: {}]
  %s5 = sld [smem:[#allocation0]]
  $region26: #{tpu_custom_call.1} parent=0
    _
  %s7 = ssub.s32 1, %s5
  %s8 = scalar_select 0, %s7, %s5
  // Predicated region
  $region2: #{tpu_custom_call.1} parent=0 // pred_check
    _
  $region3: #{tpu_custom_call.1} parent=0 // pred_check_branch
    %10 = sbr.rel (0) target = $region5
  $region4: #{tpu_custom_call.1} parent=0 // pred_region
    _
  $region5: #{tpu_custom_call.1} parent=0 // pred_fallthru
    _
  // Predicated region
  $region6: #{tpu_custom_call.1} parent=0 // pred_check
    _
  $region7: #{tpu_custom_call.1} parent=0 // pred_check_branch
    %12 = sbr.rel (0) target = $region9
  $region8: #{tpu_custom_call.1} parent=0 // pred_region
    _
  $region9: #{tpu_custom_call.1} parent=0 // pred_fallthru
    _
  // Predicated region
  $region10: #{tpu_custom_call.1} parent=0 // pred_check
    _
  $region11: #{tpu_custom_call.1} parent=0 // pred_check_branch
    %14 = sbr.rel (0) target = $region13
  $region12: #{tpu_custom_call.1} parent=0 // pred_region
    _
  $region13: #{tpu_custom_call.1} parent=0 // pred_fallthru
    _
  // Predicated region
  $region14: #{tpu_custom_call.1} parent=0 // pred_check
    _
  $region15: #{tpu_custom_call.1} parent=0 // pred_check_branch
    %16 = sbr.rel (0) target = $region17
  $region16: #{tpu_custom_call.1} parent=0 // pred_region
    _
  $region17: #{tpu_custom_call.1} parent=0 // pred_fallthru
    _
  %v18 = vld [vmem:[%s0] sm:$0xf]
  %v19 = vld [vmem:[%s0 + $0x4] sm:$0xf]
  %v20 = vld [vmem:[%s0 + $0x8] sm:$0xf]
  %v21 = vld [vmem:[%s0 + $0xc] sm:$0xf]
  %v22 = vld [vmem:[%s0 + $0x10] sm:$0xf]
  %v23 = vld [vmem:[%s0 + $0x14] sm:$0xf]
  %v24 = vld [vmem:[%s0 + $0x18] sm:$0xf]
  %v25 = vld [vmem:[%s0 + $0x1c] sm:$0xf]
  %v26 = vld [vmem:[%s0 + $0x20] sm:$0xf]
  %v27 = vld [vmem:[%s0 + $0x24] sm:$0xf]
  %v28 = vld [vmem:[%s0 + $0x28] sm:$0xf]
  %v29 = vld [vmem:[%s0 + $0x2c] sm:$0xf]
  %v30 = vld [vmem:[%s0 + $0x30] sm:$0xf]
  %v31 = vld [vmem:[%s0 + $0x34] sm:$0xf]
  %v32 = vld [vmem:[%s0 + $0x38] sm:$0xf]
  %v33 = vld [vmem:[%s0 + $0x3c] sm:$0xf]
  %v34 = vld [vmem:[%s0 + $0x40] sm:$0xf]
  %v35 = vld [vmem:[%s0 + $0x44] sm:$0xf]
  %v36 = vld [vmem:[%s0 + $0x48] sm:$0xf]
  %v37 = vld [vmem:[%s0 + $0x4c] sm:$0xf]
  %v38 = vld [vmem:[%s0 + $0x50] sm:$0xf]
  %v39 = vld [vmem:[%s0 + $0x54] sm:$0xf]
  %v40 = vld [vmem:[%s0 + $0x58] sm:$0xf]
  %v41 = vld [vmem:[%s0 + $0x5c] sm:$0xf]
  %v42 = vld [vmem:[%s0 + $0x60] sm:$0xf]
  %v43 = vld [vmem:[%s0 + $0x64] sm:$0xf]
  %v44 = vld [vmem:[%s0 + $0x68] sm:$0xf]
  %v45 = vld [vmem:[%s0 + $0x6c] sm:$0xf]
  %v46 = vld [vmem:[%s0 + $0x70] sm:$0xf]
  %v47 = vld [vmem:[%s0 + $0x74] sm:$0xf]
  %v48 = vld [vmem:[%s0 + $0x78] sm:$0xf]
  %v49 = vld [vmem:[%s0 + $0x7c] sm:$0xf]
  %v50 = vld [vmem:[%s0 + $0x80] sm:$0xf]
  %v51 = vld [vmem:[%s0 + $0x84] sm:$0xf]
  %v52 = vld [vmem:[%s0 + $0x88] sm:$0xf]
  %v53 = vld [vmem:[%s0 + $0x8c] sm:$0xf]
  %v54 = vld [vmem:[%s0 + $0x90] sm:$0xf]
  %v55 = vld [vmem:[%s0 + $0x94] sm:$0xf]
  %v56 = vld [vmem:[%s0 + $0x98] sm:$0xf]
  %v57 = vld [vmem:[%s0 + $0x9c] sm:$0xf]
  %v58 = vld [vmem:[%s0 + $0xa0] sm:$0xf]
  %v59 = vld [vmem:[%s0 + $0xa4] sm:$0xf]
  %v60 = vld [vmem:[%s0 + $0xa8] sm:$0xf]
  %v61 = vld [vmem:[%s0 + $0xac] sm:$0xf]
  %v62 = vld [vmem:[%s0 + $0xb0] sm:$0xf]
  %v63 = vld [vmem:[%s0 + $0xb4] sm:$0xf]
  %v64 = vld [vmem:[%s0 + $0xb8] sm:$0xf]
  %v65 = vld [vmem:[%s0 + $0xbc] sm:$0xf]
  %v66 = vld [vmem:[%s0 + $0xc0] sm:$0xf]
  %v67 = vld [vmem:[%s0 + $0xc4] sm:$0xf]
  %v68 = vld [vmem:[%s0 + $0xc8] sm:$0xf]
  %v69 = vld [vmem:[%s0 + $0xcc] sm:$0xf]
  %v70 = vld [vmem:[%s0 + $0xd0] sm:$0xf]
  %v71 = vld [vmem:[%s0 + $0xd4] sm:$0xf]
  %v72 = vld [vmem:[%s0 + $0xd8] sm:$0xf]
  %v73 = vld [vmem:[%s0 + $0xdc] sm:$0xf]
  %v74 = vld [vmem:[%s0 + $0xe0] sm:$0xf]
  %v75 = vld [vmem:[%s0 + $0xe4] sm:$0xf]
  %v76 = vld [vmem:[%s0 + $0xe8] sm:$0xf]
  %v77 = vld [vmem:[%s0 + $0xec] sm:$0xf]
  %v78 = vld [vmem:[%s0 + $0xf0] sm:$0xf]
  %v79 = vld [vmem:[%s0 + $0xf4] sm:$0xf]
  %v80 = vld [vmem:[%s0 + $0xf8] sm:$0xf]
  %v81 = vld [vmem:[%s0 + $0xfc] sm:$0xf]
  %v82 = vld [vmem:[%s1] sm:$0x3]
  %v147 = vunpack.c.l.b16 %v18
  %v148 = vunpack.c.l.b16 %v19
  %v149 = vunpack.c.l.b16 %v20
  %v150 = vunpack.c.l.b16 %v21
  %v151 = vunpack.c.l.b16 %v22
  %v152 = vunpack.c.l.b16 %v23
  %v153 = vunpack.c.l.b16 %v24
  %v154 = vunpack.c.l.b16 %v25
  %v155 = vunpack.c.l.b16 %v26
  %v156 = vunpack.c.l.b16 %v27
  %v157 = vunpack.c.l.b16 %v28
  %v158 = vunpack.c.l.b16 %v29
  %v159 = vunpack.c.l.b16 %v30
  %v160 = vunpack.c.l.b16 %v31
  %v161 = vunpack.c.l.b16 %v32
  %v162 = vunpack.c.l.b16 %v33
  %v163 = vunpack.c.l.b16 %v34
  %v164 = vunpack.c.l.b16 %v35
  %v165 = vunpack.c.l.b16 %v36
  %v166 = vunpack.c.l.b16 %v37
  %v167 = vunpack.c.l.b16 %v38
  %v168 = vunpack.c.l.b16 %v39
  %v169 = vunpack.c.l.b16 %v40
  %v170 = vunpack.c.l.b16 %v41
  %v171 = vunpack.c.l.b16 %v42
  %v172 = vunpack.c.l.b16 %v43
  %v173 = vunpack.c.l.b16 %v44
  %v174 = vunpack.c.l.b16 %v45
  %v175 = vunpack.c.l.b16 %v46
  %v176 = vunpack.c.l.b16 %v47
  %v177 = vunpack.c.l.b16 %v48
  %v178 = vunpack.c.l.b16 %v49
  %v179 = vunpack.c.l.b16 %v50
  %v180 = vunpack.c.l.b16 %v51
  %v181 = vunpack.c.l.b16 %v52
  %v182 = vunpack.c.l.b16 %v53
  %v183 = vunpack.c.l.b16 %v54
  %v184 = vunpack.c.l.b16 %v55
  %v185 = vunpack.c.l.b16 %v56
  %v186 = vunpack.c.l.b16 %v57
  %v187 = vunpack.c.l.b16 %v58
  %v188 = vunpack.c.l.b16 %v59
  %v189 = vunpack.c.l.b16 %v60
  %v190 = vunpack.c.l.b16 %v61
  %v191 = vunpack.c.l.b16 %v62
  %v192 = vunpack.c.l.b16 %v63
  %v193 = vunpack.c.l.b16 %v64
  %v194 = vunpack.c.l.b16 %v65
  %v195 = vunpack.c.l.b16 %v66
  %v196 = vunpack.c.l.b16 %v67
  %v197 = vunpack.c.l.b16 %v68
  %v198 = vunpack.c.l.b16 %v69
  %v199 = vunpack.c.l.b16 %v70
  %v200 = vunpack.c.l.b16 %v71
  %v201 = vunpack.c.l.b16 %v72
  %v202 = vunpack.c.l.b16 %v73
  %v203 = vunpack.c.l.b16 %v74
  %v204 = vunpack.c.l.b16 %v75
  %v205 = vunpack.c.l.b16 %v76
  %v206 = vunpack.c.l.b16 %v77
  %v207 = vunpack.c.l.b16 %v78
  %v208 = vunpack.c.l.b16 %v79
  %v209 = vunpack.c.l.b16 %v80
  %v210 = vunpack.c.l.b16 %v81
  %v211 = vpack.c.b16 %v148, %v147
  %v212 = vpack.c.b16 %v150, %v149
  %v213 = vpack.c.b16 %v152, %v151
  %v214 = vpack.c.b16 %v154, %v153
  %v215 = vpack.c.b16 %v156, %v155
  %v216 = vpack.c.b16 %v158, %v157
  %v217 = vpack.c.b16 %v160, %v159
  %v218 = vpack.c.b16 %v162, %v161
  %v219 = vpack.c.b16 %v164, %v163
  %v220 = vpack.c.b16 %v166, %v165
  %v221 = vpack.c.b16 %v168, %v167
  %v222 = vpack.c.b16 %v170, %v169
  %v223 = vpack.c.b16 %v172, %v171
  %v224 = vpack.c.b16 %v174, %v173
  %v225 = vpack.c.b16 %v176, %v175
  %v226 = vpack.c.b16 %v178, %v177
  %v227 = vpack.c.b16 %v180, %v179
  %v228 = vpack.c.b16 %v182, %v181
  %v229 = vpack.c.b16 %v184, %v183
  %v230 = vpack.c.b16 %v186, %v185
  %v231 = vpack.c.b16 %v188, %v187
  %v232 = vpack.c.b16 %v190, %v189
  %v233 = vpack.c.b16 %v192, %v191
  %v234 = vpack.c.b16 %v194, %v193
  %v235 = vpack.c.b16 %v196, %v195
  %v236 = vpack.c.b16 %v198, %v197
  %v237 = vpack.c.b16 %v200, %v199
  %v238 = vpack.c.b16 %v202, %v201
  %v239 = vpack.c.b16 %v204, %v203
  %v240 = vpack.c.b16 %v206, %v205
  %v241 = vpack.c.b16 %v208, %v207
  %v242 = vpack.c.b16 %v210, %v209
  %vm243 = vcmask 31744
  %v245 = vsel %vm243, %v211, 0
  %v248 = vsel %vm243, %v212, 0
  %v251 = vsel %vm243, %v213, 0
  %v254 = vsel %vm243, %v214, 0
  %v257 = vsel %vm243, %v215, 0
  %v260 = vsel %vm243, %v216, 0
  %v263 = vsel %vm243, %v217, 0
  %v266 = vsel %vm243, %v218, 0
  %v269 = vsel %vm243, %v219, 0
  %v272 = vsel %vm243, %v220, 0
  %v275 = vsel %vm243, %v221, 0
  %v278 = vsel %vm243, %v222, 0
  %v281 = vsel %vm243, %v223, 0
  %v284 = vsel %vm243, %v224, 0
  %v287 = vsel %vm243, %v225, 0
  %v290 = vsel %vm243, %v226, 0
  %v293 = vsel %vm243, %v227, 0
  %v296 = vsel %vm243, %v228, 0
  %v299 = vsel %vm243, %v229, 0
  %v302 = vsel %vm243, %v230, 0
  %v305 = vsel %vm243, %v231, 0
  %v308 = vsel %vm243, %v232, 0
  %v311 = vsel %vm243, %v233, 0
  %v314 = vsel %vm243, %v234, 0
  %v317 = vsel %vm243, %v235, 0
  %v320 = vsel %vm243, %v236, 0
  %v323 = vsel %vm243, %v237, 0
  %v326 = vsel %vm243, %v238, 0
  %v329 = vsel %vm243, %v239, 0
  %v332 = vsel %vm243, %v240, 0
  %v335 = vsel %vm243, %v241, 0
  %v338 = vsel %vm243, %v242, 0
  %vm340 = vcmask 1041408
  %v342 = vsel %vm340, %v82, 0
  %344 = vmatprep.subr.bf16.mxu0 0
  %345 = vmatpush1.bf16.msra.mxu0 0
  %346 = vmatprep.subr.bf16.mxu0 0
  %347 = vmatpush1.bf16.msra.mxu0 0
  %348 = vmatprep.subr.bf16.mxu0 0
  %349 = vmatpush1.bf16.msra.mxu0 0
  %350 = vmatprep.subr.bf16.mxu0 0
  %351 = vmatpush1.bf16.msra.mxu0 0
  %352 = vmatprep.subr.bf16.mxu0 0
  %353 = vmatpush1.bf16.msra.mxu0 0
  %354 = vmatprep.subr.bf16.mxu0 0
  %355 = vmatpush1.bf16.msra.mxu0 0
  %356 = vmatprep.subr.bf16.mxu0 0
  %357 = vmatpush1.bf16.msra.mxu0 0
  %358 = vmatprep.subr.bf16.mxu0 0
  %359 = vmatpush1.bf16.msra.mxu0 %v342
  %360 = vmatprep.subr.bf16.mxu0 0
  %361 = vmatpush2.bf16.msra.mxu0 0
  %362 = vmatprep.subr.bf16.mxu0 0
  %363 = vmatpush2.bf16.msra.mxu0 0
  %364 = vmatprep.subr.bf16.mxu0 0
  %365 = vmatpush2.bf16.msra.mxu0 0
  %366 = vmatprep.subr.bf16.mxu0 0
  %367 = vmatpush2.bf16.msra.mxu0 0
  %368 = vmatprep.subr.bf16.mxu0 0
  %369 = vmatpush2.bf16.msra.mxu0 0
  %370 = vmatprep.subr.bf16.mxu0 0
  %371 = vmatpush2.bf16.msra.mxu0 0
  %372 = vmatprep.subr.bf16.mxu0 0
  %373 = vmatpush2.bf16.msra.mxu0 0
  %374 = vmatprep.subr.bf16.mxu0 0
  %375 = vmatpush2.bf16.msra.mxu0 0
  %376 = vmatprep.mubr.bf16.mxu0 0
  %377 = vmatmul.mubr.bf16.gmra.mxu0 %v245
  %v378 = vpop.f32.mrf.mxu0
  %v379 = vadd.f32 0.0, %v378
  %v380 = vpop.f32.mrf.mxu0
  %v381 = vpop.f32.mrf.mxu0
  %v382 = vadd.f32 0.0, %v381
  %v383 = vpop.f32.mrf.mxu0
  %384 = vmatprep.mubr.bf16.mxu0 0
  %385 = vmatmul.mubr.bf16.gmra.mxu0 %v248
  %v386 = vpop.f32.mrf.mxu0
  %v387 = vadd.f32 0.0, %v386
  %v388 = vpop.f32.mrf.mxu0
  %v389 = vpop.f32.mrf.mxu0
  %v390 = vadd.f32 0.0, %v389
  %v391 = vpop.f32.mrf.mxu0
  %392 = vmatprep.mubr.bf16.mxu0 0
  %393 = vmatmul.mubr.bf16.gmra.mxu0 %v251
  %v394 = vpop.f32.mrf.mxu0
  %v395 = vadd.f32 0.0, %v394
  %v396 = vpop.f32.mrf.mxu0
  %v397 = vpop.f32.mrf.mxu0
  %v398 = vadd.f32 0.0, %v397
  %v399 = vpop.f32.mrf.mxu0
  %400 = vmatprep.mubr.bf16.mxu0 0
  %401 = vmatmul.mubr.bf16.gmra.mxu0 %v254
  %v402 = vpop.f32.mrf.mxu0
  %v403 = vadd.f32 0.0, %v402
  %v404 = vpop.f32.mrf.mxu0
  %v405 = vpop.f32.mrf.mxu0
  %v406 = vadd.f32 0.0, %v405
  %v407 = vpop.f32.mrf.mxu0
  %408 = vmatprep.mubr.bf16.mxu0 0
  %409 = vmatmul.mubr.bf16.gmra.mxu0 %v257
  %v410 = vpop.f32.mrf.mxu0
  %v411 = vadd.f32 0.0, %v410
  %v412 = vpop.f32.mrf.mxu0
  %v413 = vpop.f32.mrf.mxu0
  %v414 = vadd.f32 0.0, %v413
  %v415 = vpop.f32.mrf.mxu0
  %416 = vmatprep.mubr.bf16.mxu0 0
  %417 = vmatmul.mubr.bf16.gmra.mxu0 %v260
  %v418 = vpop.f32.mrf.mxu0
  %v419 = vadd.f32 0.0, %v418
  %v420 = vpop.f32.mrf.mxu0
  %v421 = vpop.f32.mrf.mxu0
  %v422 = vadd.f32 0.0, %v421
  %v423 = vpop.f32.mrf.mxu0
  %424 = vmatprep.mubr.bf16.mxu0 0
  %425 = vmatmul.mubr.bf16.gmra.mxu0 %v263
  %v426 = vpop.f32.mrf.mxu0
  %v427 = vadd.f32 0.0, %v426
  %v428 = vpop.f32.mrf.mxu0
  %v429 = vpop.f32.mrf.mxu0
  %v430 = vadd.f32 0.0, %v429
  %v431 = vpop.f32.mrf.mxu0
  %432 = vmatprep.mubr.bf16.mxu0 0
  %433 = vmatmul.mubr.bf16.gmra.mxu0 %v266
  %v434 = vpop.f32.mrf.mxu0
  %v435 = vadd.f32 0.0, %v434
  %v436 = vpop.f32.mrf.mxu0
  %v437 = vpop.f32.mrf.mxu0
  %v438 = vadd.f32 0.0, %v437
  %v439 = vpop.f32.mrf.mxu0
  %440 = vmatprep.mubr.bf16.mxu0 0
  %441 = vmatmul.mubr.bf16.gmra.mxu0 %v269
  %v442 = vpop.f32.mrf.mxu0
  %v443 = vadd.f32 0.0, %v442
  %v444 = vpop.f32.mrf.mxu0
  %v445 = vpop.f32.mrf.mxu0
  %v446 = vadd.f32 0.0, %v445
  %v447 = vpop.f32.mrf.mxu0
  %448 = vmatprep.mubr.bf16.mxu0 0
  %449 = vmatmul.mubr.bf16.gmra.mxu0 %v272
  %v450 = vpop.f32.mrf.mxu0
  %v451 = vadd.f32 0.0, %v450
  %v452 = vpop.f32.mrf.mxu0
  %v453 = vpop.f32.mrf.mxu0
  %v454 = vadd.f32 0.0, %v453
  %v455 = vpop.f32.mrf.mxu0
  %456 = vmatprep.mubr.bf16.mxu0 0
  %457 = vmatmul.mubr.bf16.gmra.mxu0 %v275
  %v458 = vpop.f32.mrf.mxu0
  %v459 = vadd.f32 0.0, %v458
  %v460 = vpop.f32.mrf.mxu0
  %v461 = vpop.f32.mrf.mxu0
  %v462 = vadd.f32 0.0, %v461
  %v463 = vpop.f32.mrf.mxu0
  %464 = vmatprep.mubr.bf16.mxu0 0
  %465 = vmatmul.mubr.bf16.gmra.mxu0 %v278
  %v466 = vpop.f32.mrf.mxu0
  %v467 = vadd.f32 0.0, %v466
  %v468 = vpop.f32.mrf.mxu0
  %v469 = vpop.f32.mrf.mxu0
  %v470 = vadd.f32 0.0, %v469
  %v471 = vpop.f32.mrf.mxu0
  %472 = vmatprep.mubr.bf16.mxu0 0
  %473 = vmatmul.mubr.bf16.gmra.mxu0 %v281
  %v474 = vpop.f32.mrf.mxu0
  %v475 = vadd.f32 0.0, %v474
  %v476 = vpop.f32.mrf.mxu0
  %v477 = vpop.f32.mrf.mxu0
  %v478 = vadd.f32 0.0, %v477
  %v479 = vpop.f32.mrf.mxu0
  %480 = vmatprep.mubr.bf16.mxu0 0
  %481 = vmatmul.mubr.bf16.gmra.mxu0 %v284
  %v482 = vpop.f32.mrf.mxu0
  %v483 = vadd.f32 0.0, %v482
  %v484 = vpop.f32.mrf.mxu0
  %v485 = vpop.f32.mrf.mxu0
  %v486 = vadd.f32 0.0, %v485
  %v487 = vpop.f32.mrf.mxu0
  %488 = vmatprep.mubr.bf16.mxu0 0
  %489 = vmatmul.mubr.bf16.gmra.mxu0 %v287
  %v490 = vpop.f32.mrf.mxu0
  %v491 = vadd.f32 0.0, %v490
  %v492 = vpop.f32.mrf.mxu0
  %v493 = vpop.f32.mrf.mxu0
  %v494 = vadd.f32 0.0, %v493
  %v495 = vpop.f32.mrf.mxu0
  %496 = vmatprep.mubr.bf16.mxu0 0
  %497 = vmatmul.mubr.bf16.gmra.mxu0 %v290
  %v498 = vpop.f32.mrf.mxu0
  %v499 = vadd.f32 0.0, %v498
  %v500 = vpop.f32.mrf.mxu0
  %v501 = vpop.f32.mrf.mxu0
  %v502 = vadd.f32 0.0, %v501
  %v503 = vpop.f32.mrf.mxu0
  %504 = vmatprep.mubr.bf16.mxu0 0
  %505 = vmatmul.mubr.bf16.gmra.mxu0 %v293
  %v506 = vpop.f32.mrf.mxu0
  %v507 = vadd.f32 0.0, %v506
  %v508 = vpop.f32.mrf.mxu0
  %v509 = vpop.f32.mrf.mxu0
  %v510 = vadd.f32 0.0, %v509
  %v511 = vpop.f32.mrf.mxu0
  %512 = vmatprep.mubr.bf16.mxu0 0
  %513 = vmatmul.mubr.bf16.gmra.mxu0 %v296
  %v514 = vpop.f32.mrf.mxu0
  %v515 = vadd.f32 0.0, %v514
  %v516 = vpop.f32.mrf.mxu0
  %v517 = vpop.f32.mrf.mxu0
  %v518 = vadd.f32 0.0, %v517
  %v519 = vpop.f32.mrf.mxu0
  %520 = vmatprep.mubr.bf16.mxu0 0
  %521 = vmatmul.mubr.bf16.gmra.mxu0 %v299
  %v522 = vpop.f32.mrf.mxu0
  %v523 = vadd.f32 0.0, %v522
  %v524 = vpop.f32.mrf.mxu0
  %v525 = vpop.f32.mrf.mxu0
  %v526 = vadd.f32 0.0, %v525
  %v527 = vpop.f32.mrf.mxu0
  %528 = vmatprep.mubr.bf16.mxu0 0
  %529 = vmatmul.mubr.bf16.gmra.mxu0 %v302
  %v530 = vpop.f32.mrf.mxu0
  %v531 = vadd.f32 0.0, %v530
  %v532 = vpop.f32.mrf.mxu0
  %v533 = vpop.f32.mrf.mxu0
  %v534 = vadd.f32 0.0, %v533
  %v535 = vpop.f32.mrf.mxu0
  %536 = vmatprep.mubr.bf16.mxu0 0
  %537 = vmatmul.mubr.bf16.gmra.mxu0 %v305
  %v538 = vpop.f32.mrf.mxu0
  %v539 = vadd.f32 0.0, %v538
  %v540 = vpop.f32.mrf.mxu0
  %v541 = vpop.f32.mrf.mxu0
  %v542 = vadd.f32 0.0, %v541
  %v543 = vpop.f32.mrf.mxu0
  %544 = vmatprep.mubr.bf16.mxu0 0
  %545 = vmatmul.mubr.bf16.gmra.mxu0 %v308
  %v546 = vpop.f32.mrf.mxu0
  %v547 = vadd.f32 0.0, %v546
  %v548 = vpop.f32.mrf.mxu0
  %v549 = vpop.f32.mrf.mxu0
  %v550 = vadd.f32 0.0, %v549
  %v551 = vpop.f32.mrf.mxu0
  %552 = vmatprep.mubr.bf16.mxu0 0
  %553 = vmatmul.mubr.bf16.gmra.mxu0 %v311
  %v554 = vpop.f32.mrf.mxu0
  %v555 = vadd.f32 0.0, %v554
  %v556 = vpop.f32.mrf.mxu0
  %v557 = vpop.f32.mrf.mxu0
  %v558 = vadd.f32 0.0, %v557
  %v559 = vpop.f32.mrf.mxu0
  %560 = vmatprep.mubr.bf16.mxu0 0
  %561 = vmatmul.mubr.bf16.gmra.mxu0 %v314
  %v562 = vpop.f32.mrf.mxu0
  %v563 = vadd.f32 0.0, %v562
  %v564 = vpop.f32.mrf.mxu0
  %v565 = vpop.f32.mrf.mxu0
  %v566 = vadd.f32 0.0, %v565
  %v567 = vpop.f32.mrf.mxu0
  %568 = vmatprep.mubr.bf16.mxu0 0
  %569 = vmatmul.mubr.bf16.gmra.mxu0 %v317
  %v570 = vpop.f32.mrf.mxu0
  %v571 = vadd.f32 0.0, %v570
  %v572 = vpop.f32.mrf.mxu0
  %v573 = vpop.f32.mrf.mxu0
  %v574 = vadd.f32 0.0, %v573
  %v575 = vpop.f32.mrf.mxu0
  %576 = vmatprep.mubr.bf16.mxu0 0
  %577 = vmatmul.mubr.bf16.gmra.mxu0 %v320
  %v578 = vpop.f32.mrf.mxu0
  %v579 = vadd.f32 0.0, %v578
  %v580 = vpop.f32.mrf.mxu0
  %v581 = vpop.f32.mrf.mxu0
  %v582 = vadd.f32 0.0, %v581
  %v583 = vpop.f32.mrf.mxu0
  %584 = vmatprep.mubr.bf16.mxu0 0
  %585 = vmatmul.mubr.bf16.gmra.mxu0 %v323
  %v586 = vpop.f32.mrf.mxu0
  %v587 = vadd.f32 0.0, %v586
  %v588 = vpop.f32.mrf.mxu0
  %v589 = vpop.f32.mrf.mxu0
  %v590 = vadd.f32 0.0, %v589
  %v591 = vpop.f32.mrf.mxu0
  %592 = vmatprep.mubr.bf16.mxu0 0
  %593 = vmatmul.mubr.bf16.gmra.mxu0 %v326
  %v594 = vpop.f32.mrf.mxu0
  %v595 = vadd.f32 0.0, %v594
  %v596 = vpop.f32.mrf.mxu0
  %v597 = vpop.f32.mrf.mxu0
  %v598 = vadd.f32 0.0, %v597
  %v599 = vpop.f32.mrf.mxu0
  %600 = vmatprep.mubr.bf16.mxu0 0
  %601 = vmatmul.mubr.bf16.gmra.mxu0 %v329
  %v602 = vpop.f32.mrf.mxu0
  %v603 = vadd.f32 0.0, %v602
  %v604 = vpop.f32.mrf.mxu0
  %v605 = vpop.f32.mrf.mxu0
  %v606 = vadd.f32 0.0, %v605
  %v607 = vpop.f32.mrf.mxu0
  %608 = vmatprep.mubr.bf16.mxu0 0
  %609 = vmatmul.mubr.bf16.gmra.mxu0 %v332
  %v610 = vpop.f32.mrf.mxu0
  %v611 = vadd.f32 0.0, %v610
  %v612 = vpop.f32.mrf.mxu0
  %v613 = vpop.f32.mrf.mxu0
  %v614 = vadd.f32 0.0, %v613
  %v615 = vpop.f32.mrf.mxu0
  %616 = vmatprep.mubr.bf16.mxu0 0
  %617 = vmatmul.mubr.bf16.gmra.mxu0 %v335
  %v618 = vpop.f32.mrf.mxu0
  %v619 = vadd.f32 0.0, %v618
  %v620 = vpop.f32.mrf.mxu0
  %v621 = vpop.f32.mrf.mxu0
  %v622 = vadd.f32 0.0, %v621
  %v623 = vpop.f32.mrf.mxu0
  %624 = vmatprep.mubr.bf16.mxu0 0
  %625 = vmatmul.mubr.bf16.gmra.mxu0 %v338
  %v626 = vpop.f32.mrf.mxu0
  %v627 = vadd.f32 0.0, %v626
  %v628 = vpop.f32.mrf.mxu0
  %v629 = vpop.f32.mrf.mxu0
  %v630 = vadd.f32 0.0, %v629
  %v631 = vpop.f32.mrf.mxu0
  %632 = vdwg.mxu0
  %v633 = vld [vmem:[%s2] sm:$0x1]
  %v635 = vlaneseq
  %v636 = vshrl.u32 %v635, 7
  %v637 = vsub.s32 0, %v636
  %v638 = vrot.slane %v633, %v637
  %v640 = vmul.f32 %v379, %v638
  %v641 = vmul.f32 %v382, %v638
  %v642 = vmul.f32 %v387, %v638
  %v643 = vmul.f32 %v390, %v638
  %v644 = vmul.f32 %v395, %v638
  %v645 = vmul.f32 %v398, %v638
  %v646 = vmul.f32 %v403, %v638
  %v647 = vmul.f32 %v406, %v638
  %v648 = vmul.f32 %v411, %v638
  %v649 = vmul.f32 %v414, %v638
  %v650 = vmul.f32 %v419, %v638
  %v651 = vmul.f32 %v422, %v638
  %v652 = vmul.f32 %v427, %v638
  %v653 = vmul.f32 %v430, %v638
  %v654 = vmul.f32 %v435, %v638
  %v655 = vmul.f32 %v438, %v638
  %v656 = vmul.f32 %v443, %v638
  %v657 = vmul.f32 %v446, %v638
  %v658 = vmul.f32 %v451, %v638
  %v659 = vmul.f32 %v454, %v638
  %v660 = vmul.f32 %v459, %v638
  %v661 = vmul.f32 %v462, %v638
  %v662 = vmul.f32 %v467, %v638
  %v663 = vmul.f32 %v470, %v638
  %v664 = vmul.f32 %v475, %v638
  %v665 = vmul.f32 %v478, %v638
  %v666 = vmul.f32 %v483, %v638
  %v667 = vmul.f32 %v486, %v638
  %v668 = vmul.f32 %v491, %v638
  %v669 = vmul.f32 %v494, %v638
  %v670 = vmul.f32 %v499, %v638
  %v671 = vmul.f32 %v502, %v638
  %v672 = vmul.f32 %v507, %v638
  %v673 = vmul.f32 %v510, %v638
  %v674 = vmul.f32 %v515, %v638
  %v675 = vmul.f32 %v518, %v638
  %v676 = vmul.f32 %v523, %v638
  %v677 = vmul.f32 %v526, %v638
  %v678 = vmul.f32 %v531, %v638
  %v679 = vmul.f32 %v534, %v638
  %v680 = vmul.f32 %v539, %v638
  %v681 = vmul.f32 %v542, %v638
  %v682 = vmul.f32 %v547, %v638
  %v683 = vmul.f32 %v550, %v638
  %v684 = vmul.f32 %v555, %v638
  %v685 = vmul.f32 %v558, %v638
  %v686 = vmul.f32 %v563, %v638
  %v687 = vmul.f32 %v566, %v638
  %v688 = vmul.f32 %v571, %v638
  %v689 = vmul.f32 %v574, %v638
  %v690 = vmul.f32 %v579, %v638
  %v691 = vmul.f32 %v582, %v638
  %v692 = vmul.f32 %v587, %v638
  %v693 = vmul.f32 %v590, %v638
  %v694 = vmul.f32 %v595, %v638
  %v695 = vmul.f32 %v598, %v638
  %v696 = vmul.f32 %v603, %v638
  %v697 = vmul.f32 %v606, %v638
  %v698 = vmul.f32 %v611, %v638
  %v699 = vmul.f32 %v614, %v638
  %v700 = vmul.f32 %v619, %v638
  %v701 = vmul.f32 %v622, %v638
  %v702 = vmul.f32 %v627, %v638
  %v703 = vmul.f32 %v630, %v638
  %v704 = vld [vmem:[%s3] sm:$0x1]
  %v706 = vlaneseq
  %v707 = vshrl.u32 %v706, 7
  %v708 = vsub.s32 0, %v707
  %v709 = vrot.slane %v704, %v708
  %v711 = vadd.f32 %v640, %v709
  %v712 = vadd.f32 %v641, %v709
  %v713 = vadd.f32 %v642, %v709
  %v714 = vadd.f32 %v643, %v709
  %v715 = vadd.f32 %v644, %v709
  %v716 = vadd.f32 %v645, %v709
  %v717 = vadd.f32 %v646, %v709
  %v718 = vadd.f32 %v647, %v709
  %v719 = vadd.f32 %v648, %v709
  %v720 = vadd.f32 %v649, %v709
  %v721 = vadd.f32 %v650, %v709
  %v722 = vadd.f32 %v651, %v709
  %v723 = vadd.f32 %v652, %v709
  %v724 = vadd.f32 %v653, %v709
  %v725 = vadd.f32 %v654, %v709
  %v726 = vadd.f32 %v655, %v709
  %v727 = vadd.f32 %v656, %v709
  %v728 = vadd.f32 %v657, %v709
  %v729 = vadd.f32 %v658, %v709
  %v730 = vadd.f32 %v659, %v709
  %v731 = vadd.f32 %v660, %v709
  %v732 = vadd.f32 %v661, %v709
  %v733 = vadd.f32 %v662, %v709
  %v734 = vadd.f32 %v663, %v709
  %v735 = vadd.f32 %v664, %v709
  %v736 = vadd.f32 %v665, %v709
  %v737 = vadd.f32 %v666, %v709
  %v738 = vadd.f32 %v667, %v709
  %v739 = vadd.f32 %v668, %v709
  %v740 = vadd.f32 %v669, %v709
  %v741 = vadd.f32 %v670, %v709
  %v742 = vadd.f32 %v671, %v709
  %v743 = vadd.f32 %v672, %v709
  %v744 = vadd.f32 %v673, %v709
  %v745 = vadd.f32 %v674, %v709
  %v746 = vadd.f32 %v675, %v709
  %v747 = vadd.f32 %v676, %v709
  %v748 = vadd.f32 %v677, %v709
  %v749 = vadd.f32 %v678, %v709
  %v750 = vadd.f32 %v679, %v709
  %v751 = vadd.f32 %v680, %v709
  %v752 = vadd.f32 %v681, %v709
  %v753 = vadd.f32 %v682, %v709
  %v754 = vadd.f32 %v683, %v709
  %v755 = vadd.f32 %v684, %v709
  %v756 = vadd.f32 %v685, %v709
  %v757 = vadd.f32 %v686, %v709
  %v758 = vadd.f32 %v687, %v709
  %v759 = vadd.f32 %v688, %v709
  %v760 = vadd.f32 %v689, %v709
  %v761 = vadd.f32 %v690, %v709
  %v762 = vadd.f32 %v691, %v709
  %v763 = vadd.f32 %v692, %v709
  %v764 = vadd.f32 %v693, %v709
  %v765 = vadd.f32 %v694, %v709
  %v766 = vadd.f32 %v695, %v709
  %v767 = vadd.f32 %v696, %v709
  %v768 = vadd.f32 %v697, %v709
  %v769 = vadd.f32 %v698, %v709
  %v770 = vadd.f32 %v699, %v709
  %v771 = vadd.f32 %v700, %v709
  %v772 = vadd.f32 %v701, %v709
  %v773 = vadd.f32 %v702, %v709
  %v774 = vadd.f32 %v703, %v709
  %v775 = vmul.f32 %v711, 0.01
  %v776 = vmul.f32 %v712, 0.01
  %v777 = vmul.f32 %v713, 0.01
  %v778 = vmul.f32 %v714, 0.01
  %v779 = vmul.f32 %v715, 0.01
  %v780 = vmul.f32 %v716, 0.01
  %v781 = vmul.f32 %v717, 0.01
  %v782 = vmul.f32 %v718, 0.01
  %v783 = vmul.f32 %v719, 0.01
  %v784 = vmul.f32 %v720, 0.01
  %v785 = vmul.f32 %v721, 0.01
  %v786 = vmul.f32 %v722, 0.01
  %v787 = vmul.f32 %v723, 0.01
  %v788 = vmul.f32 %v724, 0.01
  %v789 = vmul.f32 %v725, 0.01
  %v790 = vmul.f32 %v726, 0.01
  %v791 = vmul.f32 %v727, 0.01
  %v792 = vmul.f32 %v728, 0.01
  %v793 = vmul.f32 %v729, 0.01
  %v794 = vmul.f32 %v730, 0.01
  %v795 = vmul.f32 %v731, 0.01
  %v796 = vmul.f32 %v732, 0.01
  %v797 = vmul.f32 %v733, 0.01
  %v798 = vmul.f32 %v734, 0.01
  %v799 = vmul.f32 %v735, 0.01
  %v800 = vmul.f32 %v736, 0.01
  %v801 = vmul.f32 %v737, 0.01
  %v802 = vmul.f32 %v738, 0.01
  %v803 = vmul.f32 %v739, 0.01
  %v804 = vmul.f32 %v740, 0.01
  %v805 = vmul.f32 %v741, 0.01
  %v806 = vmul.f32 %v742, 0.01
  %v807 = vmul.f32 %v743, 0.01
  %v808 = vmul.f32 %v744, 0.01
  %v809 = vmul.f32 %v745, 0.01
  %v810 = vmul.f32 %v746, 0.01
  %v811 = vmul.f32 %v747, 0.01
  %v812 = vmul.f32 %v748, 0.01
  %v813 = vmul.f32 %v749, 0.01
  %v814 = vmul.f32 %v750, 0.01
  %v815 = vmul.f32 %v751, 0.01
  %v816 = vmul.f32 %v752, 0.01
  %v817 = vmul.f32 %v753, 0.01
  %v818 = vmul.f32 %v754, 0.01
  %v819 = vmul.f32 %v755, 0.01
  %v820 = vmul.f32 %v756, 0.01
  %v821 = vmul.f32 %v757, 0.01
  %v822 = vmul.f32 %v758, 0.01
  %v823 = vmul.f32 %v759, 0.01
  %v824 = vmul.f32 %v760, 0.01
  %v825 = vmul.f32 %v761, 0.01
  %v826 = vmul.f32 %v762, 0.01
  %v827 = vmul.f32 %v763, 0.01
  %v828 = vmul.f32 %v764, 0.01
  %v829 = vmul.f32 %v765, 0.01
  %v830 = vmul.f32 %v766, 0.01
  %v831 = vmul.f32 %v767, 0.01
  %v832 = vmul.f32 %v768, 0.01
  %v833 = vmul.f32 %v769, 0.01
  %v834 = vmul.f32 %v770, 0.01
  %v835 = vmul.f32 %v771, 0.01
  %v836 = vmul.f32 %v772, 0.01
  %v837 = vmul.f32 %v773, 0.01
  %v838 = vmul.f32 %v774, 0.01
  %v839 = vmax.f32 %v711, %v775
  %v840 = vmax.f32 %v712, %v776
  %v841 = vmax.f32 %v713, %v777
  %v842 = vmax.f32 %v714, %v778
  %v843 = vmax.f32 %v715, %v779
  %v844 = vmax.f32 %v716, %v780
  %v845 = vmax.f32 %v717, %v781
  %v846 = vmax.f32 %v718, %v782
  %v847 = vmax.f32 %v719, %v783
  %v848 = vmax.f32 %v720, %v784
  %v849 = vmax.f32 %v721, %v785
  %v850 = vmax.f32 %v722, %v786
  %v851 = vmax.f32 %v723, %v787
  %v852 = vmax.f32 %v724, %v788
  %v853 = vmax.f32 %v725, %v789
  %v854 = vmax.f32 %v726, %v790
  %v855 = vmax.f32 %v727, %v791
  %v856 = vmax.f32 %v728, %v792
  %v857 = vmax.f32 %v729, %v793
  %v858 = vmax.f32 %v730, %v794
  %v859 = vmax.f32 %v731, %v795
  %v860 = vmax.f32 %v732, %v796
  %v861 = vmax.f32 %v733, %v797
  %v862 = vmax.f32 %v734, %v798
  %v863 = vmax.f32 %v735, %v799
  %v864 = vmax.f32 %v736, %v800
  %v865 = vmax.f32 %v737, %v801
  %v866 = vmax.f32 %v738, %v802
  %v867 = vmax.f32 %v739, %v803
  %v868 = vmax.f32 %v740, %v804
  %v869 = vmax.f32 %v741, %v805
  %v870 = vmax.f32 %v742, %v806
  %v871 = vmax.f32 %v743, %v807
  %v872 = vmax.f32 %v744, %v808
  %v873 = vmax.f32 %v745, %v809
  %v874 = vmax.f32 %v746, %v810
  %v875 = vmax.f32 %v747, %v811
  %v876 = vmax.f32 %v748, %v812
  %v877 = vmax.f32 %v749, %v813
  %v878 = vmax.f32 %v750, %v814
  %v879 = vmax.f32 %v751, %v815
  %v880 = vmax.f32 %v752, %v816
  %v881 = vmax.f32 %v753, %v817
  %v882 = vmax.f32 %v754, %v818
  %v883 = vmax.f32 %v755, %v819
  %v884 = vmax.f32 %v756, %v820
  %v885 = vmax.f32 %v757, %v821
  %v886 = vmax.f32 %v758, %v822
  %v887 = vmax.f32 %v759, %v823
  %v888 = vmax.f32 %v760, %v824
  %v889 = vmax.f32 %v761, %v825
  %v890 = vmax.f32 %v762, %v826
  %v891 = vmax.f32 %v763, %v827
  %v892 = vmax.f32 %v764, %v828
  %v893 = vmax.f32 %v765, %v829
  %v894 = vmax.f32 %v766, %v830
  %v895 = vmax.f32 %v767, %v831
  %v896 = vmax.f32 %v768, %v832
  %v897 = vmax.f32 %v769, %v833
  %v898 = vmax.f32 %v770, %v834
  %v899 = vmax.f32 %v771, %v835
  %v900 = vmax.f32 %v772, %v836
  %v901 = vmax.f32 %v773, %v837
  %v902 = vmax.f32 %v774, %v838
  %v903 = vpack.c.bf16 %v840, %v839
  %v904 = vpack.c.bf16 %v842, %v841
  %v905 = vpack.c.bf16 %v844, %v843
  %v906 = vpack.c.bf16 %v846, %v845
  %v907 = vpack.c.bf16 %v848, %v847
  %v908 = vpack.c.bf16 %v850, %v849
  %v909 = vpack.c.bf16 %v852, %v851
  %v910 = vpack.c.bf16 %v854, %v853
  %v911 = vpack.c.bf16 %v856, %v855
  %v912 = vpack.c.bf16 %v858, %v857
  %v913 = vpack.c.bf16 %v860, %v859
  %v914 = vpack.c.bf16 %v862, %v861
  %v915 = vpack.c.bf16 %v864, %v863
  %v916 = vpack.c.bf16 %v866, %v865
  %v917 = vpack.c.bf16 %v868, %v867
  %v918 = vpack.c.bf16 %v870, %v869
  %v919 = vpack.c.bf16 %v872, %v871
  %v920 = vpack.c.bf16 %v874, %v873
  %v921 = vpack.c.bf16 %v876, %v875
  %v922 = vpack.c.bf16 %v878, %v877
  %v923 = vpack.c.bf16 %v880, %v879
  %v924 = vpack.c.bf16 %v882, %v881
  %v925 = vpack.c.bf16 %v884, %v883
  %v926 = vpack.c.bf16 %v886, %v885
  %v927 = vpack.c.bf16 %v888, %v887
  %v928 = vpack.c.bf16 %v890, %v889
  %v929 = vpack.c.bf16 %v892, %v891
  %v930 = vpack.c.bf16 %v894, %v893
  %v931 = vpack.c.bf16 %v896, %v895
  %v932 = vpack.c.bf16 %v898, %v897
  %v933 = vpack.c.bf16 %v900, %v899
  %v934 = vpack.c.bf16 %v902, %v901
  %v967 = vunpack.c.l.b16 %v903
  %v968 = vunpack.c.h.b16 %v903
  %v969 = vunpack.c.l.b16 %v904
  %v970 = vunpack.c.h.b16 %v904
  %v971 = vunpack.c.l.b16 %v905
  %v972 = vunpack.c.h.b16 %v905
  %v973 = vunpack.c.l.b16 %v906
  %v974 = vunpack.c.h.b16 %v906
  %v975 = vunpack.c.l.b16 %v907
  %v976 = vunpack.c.h.b16 %v907
  %v977 = vunpack.c.l.b16 %v908
  %v978 = vunpack.c.h.b16 %v908
  %v979 = vunpack.c.l.b16 %v909
  %v980 = vunpack.c.h.b16 %v909
  %v981 = vunpack.c.l.b16 %v910
  %v982 = vunpack.c.h.b16 %v910
  %v983 = vunpack.c.l.b16 %v911
  %v984 = vunpack.c.h.b16 %v911
  %v985 = vunpack.c.l.b16 %v912
  %v986 = vunpack.c.h.b16 %v912
  %v987 = vunpack.c.l.b16 %v913
  %v988 = vunpack.c.h.b16 %v913
  %v989 = vunpack.c.l.b16 %v914
  %v990 = vunpack.c.h.b16 %v914
  %v991 = vunpack.c.l.b16 %v915
  %v992 = vunpack.c.h.b16 %v915
  %v993 = vunpack.c.l.b16 %v916
  %v994 = vunpack.c.h.b16 %v916
  %v995 = vunpack.c.l.b16 %v917
  %v996 = vunpack.c.h.b16 %v917
  %v997 = vunpack.c.l.b16 %v918
  %v998 = vunpack.c.h.b16 %v918
  %v999 = vunpack.c.l.b16 %v919
  %v1000 = vunpack.c.h.b16 %v919
  %v1001 = vunpack.c.l.b16 %v920
  %v1002 = vunpack.c.h.b16 %v920
  %v1003 = vunpack.c.l.b16 %v921
  %v1004 = vunpack.c.h.b16 %v921
  %v1005 = vunpack.c.l.b16 %v922
  %v1006 = vunpack.c.h.b16 %v922
  %v1007 = vunpack.c.l.b16 %v923
  %v1008 = vunpack.c.h.b16 %v923
  %v1009 = vunpack.c.l.b16 %v924
  %v1010 = vunpack.c.h.b16 %v924
  %v1011 = vunpack.c.l.b16 %v925
  %v1012 = vunpack.c.h.b16 %v925
  %v1013 = vunpack.c.l.b16 %v926
  %v1014 = vunpack.c.h.b16 %v926
  %v1015 = vunpack.c.l.b16 %v927
  %v1016 = vunpack.c.h.b16 %v927
  %v1017 = vunpack.c.l.b16 %v928
  %v1018 = vunpack.c.h.b16 %v928
  %v1019 = vunpack.c.l.b16 %v929
  %v1020 = vunpack.c.h.b16 %v929
  %v1021 = vunpack.c.l.b16 %v930
  %v1022 = vunpack.c.h.b16 %v930
  %v1023 = vunpack.c.l.b16 %v931
  %v1024 = vunpack.c.h.b16 %v931
  %v1025 = vunpack.c.l.b16 %v932
  %v1026 = vunpack.c.h.b16 %v932
  %v1027 = vunpack.c.l.b16 %v933
  %v1028 = vunpack.c.h.b16 %v933
  %v1029 = vunpack.c.l.b16 %v934
  %v1030 = vunpack.c.h.b16 %v934
  %v1031 = vpack.c.b16 %v967, %v967
  %v1032 = vpack.c.b16 %v968, %v968
  %v1033 = vpack.c.b16 %v969, %v969
  %v1034 = vpack.c.b16 %v970, %v970
  %v1035 = vpack.c.b16 %v971, %v971
  %v1036 = vpack.c.b16 %v972, %v972
  %v1037 = vpack.c.b16 %v973, %v973
  %v1038 = vpack.c.b16 %v974, %v974
  %v1039 = vpack.c.b16 %v975, %v975
  %v1040 = vpack.c.b16 %v976, %v976
  %v1041 = vpack.c.b16 %v977, %v977
  %v1042 = vpack.c.b16 %v978, %v978
  %v1043 = vpack.c.b16 %v979, %v979
  %v1044 = vpack.c.b16 %v980, %v980
  %v1045 = vpack.c.b16 %v981, %v981
  %v1046 = vpack.c.b16 %v982, %v982
  %v1047 = vpack.c.b16 %v983, %v983
  %v1048 = vpack.c.b16 %v984, %v984
  %v1049 = vpack.c.b16 %v985, %v985
  %v1050 = vpack.c.b16 %v986, %v986
  %v1051 = vpack.c.b16 %v987, %v987
  %v1052 = vpack.c.b16 %v988, %v988
  %v1053 = vpack.c.b16 %v989, %v989
  %v1054 = vpack.c.b16 %v990, %v990
  %v1055 = vpack.c.b16 %v991, %v991
  %v1056 = vpack.c.b16 %v992, %v992
  %v1057 = vpack.c.b16 %v993, %v993
  %v1058 = vpack.c.b16 %v994, %v994
  %v1059 = vpack.c.b16 %v995, %v995
  %v1060 = vpack.c.b16 %v996, %v996
  %v1061 = vpack.c.b16 %v997, %v997
  %v1062 = vpack.c.b16 %v998, %v998
  %v1063 = vpack.c.b16 %v999, %v999
  %v1064 = vpack.c.b16 %v1000, %v1000
  %v1065 = vpack.c.b16 %v1001, %v1001
  %v1066 = vpack.c.b16 %v1002, %v1002
  %v1067 = vpack.c.b16 %v1003, %v1003
  %v1068 = vpack.c.b16 %v1004, %v1004
  %v1069 = vpack.c.b16 %v1005, %v1005
  %v1070 = vpack.c.b16 %v1006, %v1006
  %v1071 = vpack.c.b16 %v1007, %v1007
  %v1072 = vpack.c.b16 %v1008, %v1008
  %v1073 = vpack.c.b16 %v1009, %v1009
  %v1074 = vpack.c.b16 %v1010, %v1010
  %v1075 = vpack.c.b16 %v1011, %v1011
  %v1076 = vpack.c.b16 %v1012, %v1012
  %v1077 = vpack.c.b16 %v1013, %v1013
  %v1078 = vpack.c.b16 %v1014, %v1014
  %v1079 = vpack.c.b16 %v1015, %v1015
  %v1080 = vpack.c.b16 %v1016, %v1016
  %v1081 = vpack.c.b16 %v1017, %v1017
  %v1082 = vpack.c.b16 %v1018, %v1018
  %v1083 = vpack.c.b16 %v1019, %v1019
  %v1084 = vpack.c.b16 %v1020, %v1020
  %v1085 = vpack.c.b16 %v1021, %v1021
  %v1086 = vpack.c.b16 %v1022, %v1022
  %v1087 = vpack.c.b16 %v1023, %v1023
  %v1088 = vpack.c.b16 %v1024, %v1024
  %v1089 = vpack.c.b16 %v1025, %v1025
  %v1090 = vpack.c.b16 %v1026, %v1026
  %v1091 = vpack.c.b16 %v1027, %v1027
  %v1092 = vpack.c.b16 %v1028, %v1028
  %v1093 = vpack.c.b16 %v1029, %v1029
  %v1094 = vpack.c.b16 %v1030, %v1030
  %vm1159 = vcmask 27648
  %1160 = vst.msk [vmem:[%s4] sm:$0xf] %vm1159, %v1031
  %1161 = vst.msk [vmem:[%s4 + $0x4] sm:$0xf] %vm1159, %v1032
  %1162 = vst.msk [vmem:[%s4 + $0x8] sm:$0xf] %vm1159, %v1033
  %1163 = vst.msk [vmem:[%s4 + $0xc] sm:$0xf] %vm1159, %v1034
  %1164 = vst.msk [vmem:[%s4 + $0x10] sm:$0xf] %vm1159, %v1035
  %1165 = vst.msk [vmem:[%s4 + $0x14] sm:$0xf] %vm1159, %v1036
  %1166 = vst.msk [vmem:[%s4 + $0x18] sm:$0xf] %vm1159, %v1037
  %1167 = vst.msk [vmem:[%s4 + $0x1c] sm:$0xf] %vm1159, %v1038
  %1168 = vst.msk [vmem:[%s4 + $0x20] sm:$0xf] %vm1159, %v1039
  %1169 = vst.msk [vmem:[%s4 + $0x24] sm:$0xf] %vm1159, %v1040
  %1170 = vst.msk [vmem:[%s4 + $0x28] sm:$0xf] %vm1159, %v1041
  %1171 = vst.msk [vmem:[%s4 + $0x2c] sm:$0xf] %vm1159, %v1042
  %1172 = vst.msk [vmem:[%s4 + $0x30] sm:$0xf] %vm1159, %v1043
  %1173 = vst.msk [vmem:[%s4 + $0x34] sm:$0xf] %vm1159, %v1044
  %1174 = vst.msk [vmem:[%s4 + $0x38] sm:$0xf] %vm1159, %v1045
  %1175 = vst.msk [vmem:[%s4 + $0x3c] sm:$0xf] %vm1159, %v1046
  %1176 = vst.msk [vmem:[%s4 + $0x40] sm:$0xf] %vm1159, %v1047
  %1177 = vst.msk [vmem:[%s4 + $0x44] sm:$0xf] %vm1159, %v1048
  %1178 = vst.msk [vmem:[%s4 + $0x48] sm:$0xf] %vm1159, %v1049
  %1179 = vst.msk [vmem:[%s4 + $0x4c] sm:$0xf] %vm1159, %v1050
  %1180 = vst.msk [vmem:[%s4 + $0x50] sm:$0xf] %vm1159, %v1051
  %1181 = vst.msk [vmem:[%s4 + $0x54] sm:$0xf] %vm1159, %v1052
  %1182 = vst.msk [vmem:[%s4 + $0x58] sm:$0xf] %vm1159, %v1053
  %1183 = vst.msk [vmem:[%s4 + $0x5c] sm:$0xf] %vm1159, %v1054
  %1184 = vst.msk [vmem:[%s4 + $0x60] sm:$0xf] %vm1159, %v1055
  %1185 = vst.msk [vmem:[%s4 + $0x64] sm:$0xf] %vm1159, %v1056
  %1186 = vst.msk [vmem:[%s4 + $0x68] sm:$0xf] %vm1159, %v1057
  %1187 = vst.msk [vmem:[%s4 + $0x6c] sm:$0xf] %vm1159, %v1058
  %1188 = vst.msk [vmem:[%s4 + $0x70] sm:$0xf] %vm1159, %v1059
  %1189 = vst.msk [vmem:[%s4 + $0x74] sm:$0xf] %vm1159, %v1060
  %1190 = vst.msk [vmem:[%s4 + $0x78] sm:$0xf] %vm1159, %v1061
  %1191 = vst.msk [vmem:[%s4 + $0x7c] sm:$0xf] %vm1159, %v1062
  %1192 = vst.msk [vmem:[%s4 + $0x80] sm:$0xf] %vm1159, %v1063
  %1193 = vst.msk [vmem:[%s4 + $0x84] sm:$0xf] %vm1159, %v1064
  %1194 = vst.msk [vmem:[%s4 + $0x88] sm:$0xf] %vm1159, %v1065
  %1195 = vst.msk [vmem:[%s4 + $0x8c] sm:$0xf] %vm1159, %v1066
  %1196 = vst.msk [vmem:[%s4 + $0x90] sm:$0xf] %vm1159, %v1067
  %1197 = vst.msk [vmem:[%s4 + $0x94] sm:$0xf] %vm1159, %v1068
  %1198 = vst.msk [vmem:[%s4 + $0x98] sm:$0xf] %vm1159, %v1069
  %1199 = vst.msk [vmem:[%s4 + $0x9c] sm:$0xf] %vm1159, %v1070
  %1200 = vst.msk [vmem:[%s4 + $0xa0] sm:$0xf] %vm1159, %v1071
  %1201 = vst.msk [vmem:[%s4 + $0xa4] sm:$0xf] %vm1159, %v1072
  %1202 = vst.msk [vmem:[%s4 + $0xa8] sm:$0xf] %vm1159, %v1073
  %1203 = vst.msk [vmem:[%s4 + $0xac] sm:$0xf] %vm1159, %v1074
  %1204 = vst.msk [vmem:[%s4 + $0xb0] sm:$0xf] %vm1159, %v1075
  %1205 = vst.msk [vmem:[%s4 + $0xb4] sm:$0xf] %vm1159, %v1076
  %1206 = vst.msk [vmem:[%s4 + $0xb8] sm:$0xf] %vm1159, %v1077
  %1207 = vst.msk [vmem:[%s4 + $0xbc] sm:$0xf] %vm1159, %v1078
  %1208 = vst.msk [vmem:[%s4 + $0xc0] sm:$0xf] %vm1159, %v1079
  %1209 = vst.msk [vmem:[%s4 + $0xc4] sm:$0xf] %vm1159, %v1080
  %1210 = vst.msk [vmem:[%s4 + $0xc8] sm:$0xf] %vm1159, %v1081
  %1211 = vst.msk [vmem:[%s4 + $0xcc] sm:$0xf] %vm1159, %v1082
  %1212 = vst.msk [vmem:[%s4 + $0xd0] sm:$0xf] %vm1159, %v1083
  %1213 = vst.msk [vmem:[%s4 + $0xd4] sm:$0xf] %vm1159, %v1084
  %1214 = vst.msk [vmem:[%s4 + $0xd8] sm:$0xf] %vm1159, %v1085
  %1215 = vst.msk [vmem:[%s4 + $0xdc] sm:$0xf] %vm1159, %v1086
  %1216 = vst.msk [vmem:[%s4 + $0xe0] sm:$0xf] %vm1159, %v1087
  %1217 = vst.msk [vmem:[%s4 + $0xe4] sm:$0xf] %vm1159, %v1088
  %1218 = vst.msk [vmem:[%s4 + $0xe8] sm:$0xf] %vm1159, %v1089
  %1219 = vst.msk [vmem:[%s4 + $0xec] sm:$0xf] %vm1159, %v1090
  %1220 = vst.msk [vmem:[%s4 + $0xf0] sm:$0xf] %vm1159, %v1091
  %1221 = vst.msk [vmem:[%s4 + $0xf4] sm:$0xf] %vm1159, %v1092
  %1222 = vst.msk [vmem:[%s4 + $0xf8] sm:$0xf] %vm1159, %v1093
  %1223 = vst.msk [vmem:[%s4 + $0xfc] sm:$0xf] %vm1159, %v1094
  // Predicated region
  $region18: #{tpu_custom_call.1} parent=0 // pred_check
    _
  $region19: #{tpu_custom_call.1} parent=0 // pred_check_branch
    %1225 = sbr.rel (0) target = $region21
  $region20: #{tpu_custom_call.1} parent=0 // pred_region
    _
  $region21: #{tpu_custom_call.1} parent=0 // pred_fallthru
    _
  // Predicated region
  $region22: #{tpu_custom_call.1} parent=0 // pred_check
    _
  $region23: #{tpu_custom_call.1} parent=0 // pred_check_branch
    %1227 = sbr.rel (0) target = $region25
  $region24: #{tpu_custom_call.1} parent=0 // pred_region
    _
  $region25: #{tpu_custom_call.1} parent=0 // pred_fallthru
    _

</llo_original>
